<compile_context>
chip_gen: v5e
topology: v5e:2x2
jax: 0.10.0
libtpu: 0.0.40
codegen_flags: <defaults>
</compile_context>

<pallas_src>
import jax
import jax.numpy as jnp
from jax.experimental import pallas as pl
from jax.experimental.pallas import tpu as pltpu


def _linear_kernel(x_ref, w_ref, b_ref, o_ref):
    # x_ref: (IN_F, tb) VMEM block, batch on lanes (lane-dense).
    # w_ref: (IN_F,) SMEM scalars, b_ref: (1,) SMEM scalar.
    # o_ref: (1, tb) VMEM block, lane-dense output row.
    x = x_ref[...]                                   # (IN_F, tb) f32
    in_f, tb = x.shape
    acc = jnp.full((1, tb), b_ref[0], dtype=jnp.float32)
    for f in range(in_f):                            # static unroll (IN_F = 3)
        acc = acc + w_ref[f] * x[f:f + 1, :]         # scalar-broadcast VPU FMA
    o_ref[...] = acc.astype(o_ref.dtype)


def _round_up(n: int, m: int) -> int:
    return ((n + m - 1) // m) * m


def multivariate_linear_regression(x, weight, bias, *,
                                   max_batch_tile=65536,
                                   min_pallas_batch=0):
    """Forward pass of MultivariateLinearRegressionModel: y = x @ W.T + b.

    x: (B, 3) float32, weight: (1, 3), bias: (1,).  Returns (B, 1).
    """
    B, in_f = x.shape
    out_f = weight.shape[0]
    if out_f != 1:
        raise ValueError("Kernel is specialized to nn.Linear(in_features, 1).")

    # Tiny batches are launch/DMA-latency bound; optionally bypass Pallas.
    # Default threshold is 0 so the Pallas path is always exercised here.
    if B < min_pallas_batch:
        return x @ weight.T + bias

    tb = min(_round_up(B, 128), _round_up(max_batch_tile, 128))
    b_pad = _round_up(B, tb)
    num_blocks = b_pad // tb

    # Feature-major, lane-dense presentation; zero-pad the batch tail.
    xt = x.T                                          # (IN_F, B)
    if b_pad != B:
        xt = jnp.pad(xt, ((0, 0), (0, b_pad - B)))

    w_flat = weight.reshape(in_f).astype(jnp.float32)  # (IN_F,) -> SMEM
    b_flat = bias.reshape(out_f).astype(jnp.float32)   # (1,)    -> SMEM

    cost = pl.CostEstimate(
        flops=2 * B * in_f * out_f + B * out_f,
        transcendentals=0,
        bytes_accessed=(xt.size + w_flat.size + b_flat.size + b_pad * out_f) * 4,
    )

    out_row = pl.pallas_call(
        _linear_kernel,
        out_shape=jax.ShapeDtypeStruct((1, b_pad), x.dtype),
        grid=(num_blocks,),
        in_specs=[
            pl.BlockSpec((in_f, tb), lambda i: (0, i)),         # x: lane-dense batch tiles
            pl.BlockSpec(memory_space=pltpu.MemorySpace.SMEM),  # weight scalars
            pl.BlockSpec(memory_space=pltpu.MemorySpace.SMEM),  # bias scalar
        ],
        out_specs=pl.BlockSpec((1, tb), lambda i: (0, i)),      # lane-dense output row
        compiler_params=pltpu.CompilerParams(
            dimension_semantics=("parallel",),
        ),
        cost_estimate=cost,
    )(xt, w_flat, b_flat)

    # Strip padding and present torch-style (B, 1) output.
    return out_row[0, :B].reshape(B, out_f)


if __name__ == "__main__":
    key = jax.random.PRNGKey(0)
    kx, kw, kb = jax.random.split(key, 3)

    IN_F, OUT_F = 3, 1
    # Deterministic init mimicking nn.Linear default uniform(-1/sqrt(3), 1/sqrt(3)).
    bound = 1.0 / jnp.sqrt(jnp.float32(IN_F))
    weight = jax.random.uniform(kw, (OUT_F, IN_F), jnp.float32, -bound, bound)
    bias = jax.random.uniform(kb, (OUT_F,), jnp.float32, -bound, bound)

    # Case 1: tiny batch (pads to one 128-wide lane-dense block, grid=(1,)).
    B1 = 8
    x1 = jax.random.normal(kx, (B1, IN_F), dtype=jnp.float32)
    out1 = multivariate_linear_regression(x1, weight, bias)
    jax.block_until_ready(out1)
    ref1 = x1 @ weight.T + bias
    assert out1.shape == (B1, OUT_F)
    assert jnp.allclose(out1, ref1, atol=1e-5, rtol=1e-5)

    # Case 2: non-divisible batch with a multi-block grid (1000 -> 1024, grid=(4,)).
    B2 = 1000
    x2 = jax.random.normal(jax.random.PRNGKey(1), (B2, IN_F), dtype=jnp.float32)
    out2 = multivariate_linear_regression(x2, weight, bias, max_batch_tile=256)
    jax.block_until_ready(out2)
    ref2 = x2 @ weight.T + bias
    assert out2.shape == (B2, OUT_F)
    assert jnp.allclose(out2, ref2, atol=1e-5, rtol=1e-5)

    print("KERNEL_OK")
</pallas_src>

<mosaic_0001>
module attributes {stable_mosaic.version = 11 : i64} {
  func.func @_linear_kernel(%arg0: i32, %arg1: memref<3x128xf32, #tpu.memory_space<vmem>>, %arg2: memref<3xf32, #tpu.memory_space<smem>>, %arg3: memref<1xf32, #tpu.memory_space<smem>>, %arg4: memref<1x128xf32, #tpu.memory_space<vmem>>) attributes {dimension_semantics = [#tpu.dimension_semantics<parallel>], iteration_bounds = array<i64: 1>, scalar_prefetch = 0 : i64, scratch_operands = 0 : i64, tpu.core_type = #tpu.core_type<tc>, window_params = [{transform_indices = @transform_0, window_bounds = array<i64: 3, 128>}, {transform_indices = @transform_1, window_bounds = array<i64: 3>}, {transform_indices = @transform_2, window_bounds = array<i64: 1>}, {transform_indices = @transform_3, window_bounds = array<i64: 1, 128>}]} {
    %c0 = arith.constant 0 : index
    %c0_0 = arith.constant 0 : index
    %0 = vector.load %arg1[%c0, %c0_0] : memref<3x128xf32, #tpu.memory_space<vmem>>, vector<3x128xf32>
    %c0_1 = arith.constant 0 : index
    %1 = memref.load %arg3[%c0_1] : memref<1xf32, #tpu.memory_space<smem>>
    %2 = vector.broadcast %1 : f32 to vector<1x128xf32>
    %c0_2 = arith.constant 0 : index
    %3 = memref.load %arg2[%c0_2] : memref<3xf32, #tpu.memory_space<smem>>
    %4 = vector.extract_strided_slice %0 {offsets = [0, 0], sizes = [1, 128], strides = [1, 1]} : vector<3x128xf32> to vector<1x128xf32>
    %5 = vector.broadcast %3 : f32 to vector<1x128xf32>
    %6 = arith.mulf %5, %4 : vector<1x128xf32>
    %7 = arith.addf %2, %6 : vector<1x128xf32>
    %c1 = arith.constant 1 : index
    %8 = memref.load %arg2[%c1] : memref<3xf32, #tpu.memory_space<smem>>
    %9 = vector.extract_strided_slice %0 {offsets = [1, 0], sizes = [1, 128], strides = [1, 1]} : vector<3x128xf32> to vector<1x128xf32>
    %10 = vector.broadcast %8 : f32 to vector<1x128xf32>
    %11 = arith.mulf %10, %9 : vector<1x128xf32>
    %12 = arith.addf %7, %11 : vector<1x128xf32>
    %c2 = arith.constant 2 : index
    %13 = memref.load %arg2[%c2] : memref<3xf32, #tpu.memory_space<smem>>
    %14 = vector.extract_strided_slice %0 {offsets = [2, 0], sizes = [1, 128], strides = [1, 1]} : vector<3x128xf32> to vector<1x128xf32>
    %15 = vector.broadcast %13 : f32 to vector<1x128xf32>
    %16 = arith.mulf %15, %14 : vector<1x128xf32>
    %17 = arith.addf %12, %16 : vector<1x128xf32>
    %c0_3 = arith.constant 0 : index
    %c0_4 = arith.constant 0 : index
    %18 = vector.load %arg4[%c0_3, %c0_4] : memref<1x128xf32, #tpu.memory_space<vmem>>, vector<1x128xf32>
    tpu.vector_store %arg4[%c0_3, %c0_4], %17 {strides = array<i32>} : memref<1x128xf32, #tpu.memory_space<vmem>>, vector<1x128xf32>,
    return
  }
  func.func @transform_0(%arg0: i32) -> (i32, i32) {
    %c0_i32 = arith.constant 0 : i32
    %c0_i32_0 = arith.constant 0 : i32
    return %c0_i32, %arg0 : i32, i32
  }
  func.func @transform_1(%arg0: i32) -> i32 {
    %c0_i32 = arith.constant 0 : i32
    %c0_i32_0 = arith.constant 0 : i32
    return %c0_i32 : i32
  }
  func.func @transform_2(%arg0: i32) -> i32 {
    %c0_i32 = arith.constant 0 : i32
    %c0_i32_0 = arith.constant 0 : i32
    return %c0_i32 : i32
  }
  func.func @transform_3(%arg0: i32) -> (i32, i32) {
    %c0_i32 = arith.constant 0 : i32
    %c0_i32_0 = arith.constant 0 : i32
    return %c0_i32, %arg0 : i32, i32
  }
}

</mosaic_0001>

<llo_original>
// kernel: tpu_custom_call.1
$region0: #{tpu_custom_call.1}
  #allocation0 [shape = 'u32[]', space=smem, size = 0x4, offset = 0x4, fixed_abs, tag = 'smem constant byte address 0x4 - core index']
  #allocation1 [shape = 'u32[72,128]{1,0:T(1,128)}', space=vmem, size = 0x9000, scoped, tag = 'internal scratch']
  #allocation2 [shape = 'f32[1]{0:T(128)S(6)}', space=smem, size = 0x200, scoped, tag = 'scoped memory for tpu_custom_call.1']
  %s0 = inlined_call_operand.hbm [shape: f32[3,128], index: 0, kind: input, shape index: {}]
  %s1 = inlined_call_operand.vmem [shape: f32[3], index: 1, kind: input, shape index: {}]
  %s2 = inlined_call_operand.<no memory space> [shape: f32[1], index: 2, kind: input, shape index: {}]
  %s3 = inlined_call_operand.hbm [shape: f32[1,128], index: 3, kind: output, shape index: {}]
  %s4 = sld [smem:[#allocation0]]
  $region30: #{tpu_custom_call.1} parent=0
    _
  %s6 = ssub.s32 1, %s4
  %s7 = scalar_select 0, %s6, %s4
  %8 = sst [smem:[#allocation2]] %s2
  $region1: #{tpu_custom_call.1} parent=0
    #allocation3 [shape = 'u8[2048]{0}', space=vmem, size = 0x800, scoped, tag = 'input window, operand 0, single buffered']
    #allocation4 [shape = 's32[1]{0}', space=sflag, size = 0x4, scoped, tag = 'scoped memory for tpu_custom_call.1']
    #allocation5 [shape = 's32[1]{0}', space=sflag, size = 0x4, scoped, tag = 'scoped memory for tpu_custom_call.1']
    #allocation6 [shape = 's32[1]{0}', space=sflag, size = 0x4, scoped, tag = 'scoped memory for tpu_custom_call.1']
    #allocation7 [shape = 'u8[512]{0}', space=smem, size = 0x200, scoped, tag = 'input window, operand 1, single buffered']
    #allocation8 [shape = 'u8[512]{0}', space=vmem, size = 0x400, scoped, tag = 'output window, operand 0, single buffered']
    %9 = vsyncpa [#allocation4], 0
    %10 = vsyncpa [#allocation6], 0
    %11 = vsyncpa [#allocation5], 0
    // Predicated region
    $region2: #{tpu_custom_call.1} parent=1 // pred_check
      _
    $region3: #{tpu_custom_call.1} parent=1 // pred_check_branch
      %13 = sbr.rel (0) target = $region5
    $region4: #{tpu_custom_call.1} parent=1 // pred_region
      %15 = vsyncadd [#allocation4], 0
      %s17 = sshll.u32 %s0, 4
      %s18 = int_to_ptr.hbm [resolvable:$true] %s17
      %s19 = sshll.u32 [#allocation3], 4
      %s20 = int_to_ptr.vmem [resolvable:$true] %s19
      %22 = dma.hbm_to_vmem [thread:$0]  %s18, 64, %s20, [#allocation4]
    $region5: #{tpu_custom_call.1} parent=1 // pred_fallthru
      _
    // Predicated region
    $region6: #{tpu_custom_call.1} parent=1 // pred_check
      _
    $region7: #{tpu_custom_call.1} parent=1 // pred_check_branch
      %24 = sbr.rel (0) target = $region9
    $region8: #{tpu_custom_call.1} parent=1 // pred_region
      %26 = vsyncadd [#allocation6], 0
      %s28 = sshll.u32 %s1, 4
      %s29 = int_to_ptr.vmem [resolvable:$true] %s28
      %31 = dma.vmem_to_smem %s29, 16, [#allocation7], [#allocation6]
    $region9: #{tpu_custom_call.1} parent=1 // pred_fallthru
      _
    // Predicated region
    $region10: #{tpu_custom_call.1} parent=1 // pred_check
      _
    $region11: #{tpu_custom_call.1} parent=1 // pred_check_branch
      %33 = sbr.rel (0) target = $region13
    $region12: #{tpu_custom_call.1} parent=1 // pred_region
      _
    $region13: #{tpu_custom_call.1} parent=1 // pred_fallthru
      _
    // Predicated region
    $region14: #{tpu_custom_call.1} parent=1 // pred_check
      _
    $region15: #{tpu_custom_call.1} parent=1 // pred_check_branch
      %35 = sbr.rel (0) target = $region17
    $region16: #{tpu_custom_call.1} parent=1 // pred_region
      %37 = dma.done [#allocation4], 64
    $region17: #{tpu_custom_call.1} parent=1 // pred_fallthru
      _
    // Predicated region
    $region18: #{tpu_custom_call.1} parent=1 // pred_check
      _
    $region19: #{tpu_custom_call.1} parent=1 // pred_check_branch
      %39 = sbr.rel (0) target = $region21
    $region20: #{tpu_custom_call.1} parent=1 // pred_region
      %41 = dma.done [#allocation6], 16
    $region21: #{tpu_custom_call.1} parent=1 // pred_fallthru
      _
    %42 = sfence
    %v43 = vld [vmem:[#allocation3] sm:$0x7]
    %s44 = sld [smem:[#allocation2]]
    %v45 = vstv %s44
    %s46 = sld [smem:[#allocation7]]
    %v47 = vstv %s46
    %v48 = vmul.f32 %v47, %v43
    %v49 = vadd.f32 %v45, %v48
    %s50 = sld [smem:[#allocation7 + $0x1]]
    %v51 = vstv %s50
    %v52 = vmul.f32 %v51, %v43
    %v54 = vrot.slane %v52, 1
    %v56 = vadd.f32 %v49, %v54
    %s57 = sld [smem:[#allocation7 + $0x2]]
    %v58 = vstv %s57
    %v59 = vmul.f32 %v58, %v43
    %v61 = vrot.slane %v59, 2
    %v63 = vadd.f32 %v56, %v61
    %64 = vst [vmem:[#allocation8] sm:$0x1] %v63
    // Predicated region
    $region22: #{tpu_custom_call.1} parent=1 // pred_check
      _
    $region23: #{tpu_custom_call.1} parent=1 // pred_check_branch
      %66 = sbr.rel (0) target = $region25
    $region24: #{tpu_custom_call.1} parent=1 // pred_region
      %68 = vsyncadd [#allocation5], 0
      %s70 = sshll.u32 [#allocation8], 4
      %s71 = int_to_ptr.vmem [resolvable:$true] %s70
      %s72 = sshll.u32 %s3, 4
      %s73 = int_to_ptr.hbm [resolvable:$true] %s72
      %75 = dma.vmem_to_hbm [thread:$0]  %s71, 16, %s73, [#allocation5]
    $region25: #{tpu_custom_call.1} parent=1 // pred_fallthru
      _
    // Predicated region
    $region26: #{tpu_custom_call.1} parent=1 // pred_check
      _
    $region27: #{tpu_custom_call.1} parent=1 // pred_check_branch
      %77 = sbr.rel (0) target = $region29
    $region28: #{tpu_custom_call.1} parent=1 // pred_region
      %79 = dma.done [#allocation5], 16
    $region29: #{tpu_custom_call.1} parent=1 // pred_fallthru
      _
    %80 = vsyncpa [#allocation4], 1
    %81 = vsyncpa [#allocation5], 1
    %82 = vsyncpa [#allocation6], 1

</llo_original>
